<compile_context>
chip_gen: v5e
topology: v5e:2x2
jax: 0.10.0
libtpu: 0.0.40
codegen_flags: <defaults>
</compile_context>

<pallas_src>
import jax
import jax.numpy as jnp
from jax.experimental import pallas as pl
from jax.experimental.pallas import tpu as pltpu


def _round_up(n, m):
    return ((n + m - 1) // m) * m


def _row_tiling(n):
    """Pick (row tile, padded node count). bf16 sublane packing => 16-row pad."""
    n16 = _round_up(max(n, 16), 16)
    if n16 <= 256:
        return n16, n16                      # single full row tile
    tm = 256                                 # fills v6e/v7x 256-wide MXU
    return tm, _round_up(n16, tm)


def _vmem_limit_bytes(*buf_bytes):
    # Conservative budget: double-buffer every operand + 4 MiB headroom.
    # Floor 16 MiB (v5e default), cap 48 MiB (safe inside v7x's 64 MiB VMEM).
    need = 2 * sum(int(b) for b in buf_bytes) + (4 << 20)
    return int(min(max(need, 16 << 20), 48 << 20))


# ---------------------------------------------------------------------------
# Kernels
# ---------------------------------------------------------------------------

def make_gin_layer_kernel(c_pad, h_pad):
    """Fused per-layer kernel (used when Cp <= Hp):

        z = relu((A_tile @ h) @ W1 + b1) @ W2 + b2

    Refs: a (TM, Np) bf16 | h (Np, Cp) bf16 resident |
          wcat (Cp+Hp, Hp) bf16 resident | bcat (2, Hp) f32 resident |
          out (TM, Hp) bf16.
    """
    def kernel(a_ref, h_ref, w_ref, b_ref, o_ref):
        b = b_ref[...]                                        # (2, Hp) f32
        # aggregation + self term in one MXU matmul: (A + I) @ h, f32 acc
        agg = jnp.dot(a_ref[...], h_ref[...],
                      preferred_element_type=jnp.float32)     # (TM, Cp) f32
        # MLP: bf16 matmul operands, f32 accumulation; bias/ReLU stay f32
        # (safe on v5e's f32-only VPU).
        z1 = jnp.dot(agg.astype(jnp.bfloat16), w_ref[0:c_pad, :],
                     preferred_element_type=jnp.float32) + b[0:1, :]
        z1 = jnp.maximum(z1, 0.0)
        z2 = jnp.dot(z1.astype(jnp.bfloat16), w_ref[c_pad:c_pad + h_pad, :],
                     preferred_element_type=jnp.float32) + b[1:2, :]
        o_ref[...] = z2.astype(o_ref.dtype)                   # lane-dense bf16
    return kernel


def premul_kernel(h_ref, w1_ref, y_ref):
    """Associativity pre-pass (Cp > Hp): y_tile = h_tile @ W1."""
    y_ref[...] = jnp.dot(h_ref[...], w1_ref[...],
                         preferred_element_type=jnp.float32).astype(y_ref.dtype)


def agg_mlp_kernel(a_ref, y_ref, w2_ref, b_ref, o_ref):
    """Associativity main pass: z = relu(A_tile @ (h @ W1) + b1) @ W2 + b2."""
    b = b_ref[...]
    agg = jnp.dot(a_ref[...], y_ref[...],
                  preferred_element_type=jnp.float32)          # (TM, Hp) f32
    z1 = jnp.maximum(agg + b[0:1, :], 0.0)
    z2 = jnp.dot(z1.astype(jnp.bfloat16), w2_ref[...],
                 preferred_element_type=jnp.float32) + b[1:2, :]
    o_ref[...] = z2.astype(o_ref.dtype)


# ---------------------------------------------------------------------------
# Per-layer driver
# ---------------------------------------------------------------------------

def _gin_layer(a_p, h_p, w1, b1, w2, b2, *, tm, n_pad, h_pad, h_out):
    c_prev = w1.shape[0]
    c_pad = h_p.shape[1]
    grid = (n_pad // tm,)
    sem = ("parallel",)          # row tiles are independent -> megacore split

    # Padded weights/biases. Padded rows/cols are zero so padded channels of h
    # contribute nothing and padded output channels stay zero.
    w1p = jnp.zeros((c_pad, h_pad), jnp.bfloat16).at[:c_prev, :h_out].set(
        w1.astype(jnp.bfloat16))
    w2p = jnp.zeros((h_pad, h_pad), jnp.bfloat16).at[:h_out, :h_out].set(
        w2.astype(jnp.bfloat16))
    bcat = jnp.zeros((2, h_pad), jnp.float32)
    bcat = bcat.at[0, :h_out].set(b1.reshape(-1).astype(jnp.float32))
    bcat = bcat.at[1, :h_out].set(b2.reshape(-1).astype(jnp.float32))

    out_shape = jax.ShapeDtypeStruct((n_pad, h_pad), jnp.bfloat16)
    a_spec = pl.BlockSpec((tm, n_pad), lambda i: (i, 0))
    out_spec = pl.BlockSpec((tm, h_pad), lambda i: (i, 0))

    def resident(shape):
        return pl.BlockSpec(shape, lambda i: (0, 0))

    if c_pad > h_pad:
        # (A @ h) @ W1 == A @ (h @ W1): the dominant Np x Np matmul's output
        # width drops from Cp to Hp and the f32 intermediate shrinks too.
        y = pl.pallas_call(
            premul_kernel,
            out_shape=jax.ShapeDtypeStruct((n_pad, h_pad), jnp.bfloat16),
            grid=grid,
            in_specs=[pl.BlockSpec((tm, c_pad), lambda i: (i, 0)),
                      resident((c_pad, h_pad))],
            out_specs=out_spec,
            compiler_params=pltpu.CompilerParams(
                dimension_semantics=sem,
                vmem_limit_bytes=_vmem_limit_bytes(
                    tm * c_pad * 2, c_pad * h_pad * 2, tm * h_pad * 2)),
            cost_estimate=pl.CostEstimate(
                flops=2 * n_pad * c_pad * h_pad,
                transcendentals=0,
                bytes_accessed=(n_pad * c_pad + c_pad * h_pad
                                + n_pad * h_pad) * 2),
        )(h_p, w1p)

        return pl.pallas_call(
            agg_mlp_kernel,
            out_shape=out_shape,
            grid=grid,
            in_specs=[a_spec, resident((n_pad, h_pad)),
                      resident((h_pad, h_pad)), resident((2, h_pad))],
            out_specs=out_spec,
            compiler_params=pltpu.CompilerParams(
                dimension_semantics=sem,
                vmem_limit_bytes=_vmem_limit_bytes(
                    tm * n_pad * 2, n_pad * h_pad * 2, h_pad * h_pad * 2,
                    2 * h_pad * 4, tm * h_pad * 2)),
            cost_estimate=pl.CostEstimate(
                flops=2 * n_pad * (n_pad * h_pad + h_pad * h_pad),
                transcendentals=0,
                bytes_accessed=(n_pad * n_pad + n_pad * h_pad + h_pad * h_pad
                                + n_pad * h_pad) * 2 + 2 * h_pad * 4),
        )(a_p, y, w2p, bcat)

    wcat = jnp.concatenate([w1p, w2p], axis=0)     # (Cp + Hp, Hp) bf16 slab
    kernel = make_gin_layer_kernel(c_pad, h_pad)
    return pl.pallas_call(
        kernel,
        out_shape=out_shape,
        grid=grid,
        in_specs=[a_spec, resident((n_pad, c_pad)),
                  resident((c_pad + h_pad, h_pad)), resident((2, h_pad))],
        out_specs=out_spec,
        compiler_params=pltpu.CompilerParams(
            dimension_semantics=sem,
            vmem_limit_bytes=_vmem_limit_bytes(
                tm * n_pad * 2, n_pad * c_pad * 2,
                (c_pad + h_pad) * h_pad * 2, 2 * h_pad * 4, tm * h_pad * 2)),
        cost_estimate=pl.CostEstimate(
            flops=2 * n_pad * (n_pad * c_pad + c_pad * h_pad + h_pad * h_pad),
            transcendentals=0,
            bytes_accessed=(n_pad * n_pad + n_pad * c_pad
                            + (c_pad + h_pad) * h_pad + n_pad * h_pad) * 2
                           + 2 * h_pad * 4),
    )(a_p, h_p, wcat, bcat)


# ---------------------------------------------------------------------------
# Forward pass (cat=True)
# ---------------------------------------------------------------------------

@jax.jit
def gingnn_forward_pallas(x, adj, params):
    """GINGNN.forward with cat=True.

    x:      (N, Cin) f32 node features
    adj:    (N, N)   f32 dense adjacency A[dst, src] (no self loops)
    params: list of (w1 (Cin,H), b1 (1,H), w2 (H,H), b2 (1,H)) per layer
    returns (N, Cin + n_layers * H) f32
    """
    n, c_in = x.shape
    h_out = params[0][0].shape[1]

    tm, n_pad = _row_tiling(n)
    c_pad = _round_up(c_in, 128)
    h_pad = _round_up(h_out, 128)

    # Fold the GIN self-loop into the adjacency (eps=0): (A + I) @ x.
    # bf16 adjacency is exact for edge multiplicities <= 256.
    a_full = adj + jnp.eye(n, dtype=adj.dtype)
    a_p = jnp.zeros((n_pad, n_pad), jnp.bfloat16).at[:n, :n].set(
        a_full.astype(jnp.bfloat16))
    h_p = jnp.zeros((n_pad, c_pad), jnp.bfloat16).at[:n, :c_in].set(
        x.astype(jnp.bfloat16))

    # NOTE: padded node rows (n..n_pad) pick up relu(b1)@W2 + b2 garbage, but
    # A's padded columns are zero so they never leak into real rows; the
    # wrapper slices [:n] below.
    outs = []
    for (w1, b1, w2, b2) in params:
        h_p = _gin_layer(a_p, h_p, w1, b1, w2, b2,
                         tm=tm, n_pad=n_pad, h_pad=h_pad, h_out=h_out)
        outs.append(h_p)

    # cat=True: [x, layer1, ..., layerL] — cheap XLA glue, upcast bf16 -> f32.
    segs = [x] + [o[:n, :h_out].astype(x.dtype) for o in outs]
    return jnp.concatenate(segs, axis=-1)


# ---------------------------------------------------------------------------
# Reference, init, glue
# ---------------------------------------------------------------------------

def gingnn_reference(x, adj, params):
    """Pure-JAX f32 reference for correctness checking."""
    a_full = adj + jnp.eye(x.shape[0], dtype=adj.dtype)
    xs = [x]
    h = x
    for (w1, b1, w2, b2) in params:
        agg = a_full @ h
        z = jnp.maximum(agg @ w1 + b1.reshape(1, -1), 0.0) @ w2 + b2.reshape(1, -1)
        xs.append(z)
        h = z
    return jnp.concatenate(xs, axis=-1)


def xavier_uniform(key, fan_in, fan_out, dtype=jnp.float32):
    limit = (6.0 / (fan_in + fan_out)) ** 0.5
    return jax.random.uniform(
        key, (fan_in, fan_out), dtype=dtype, minval=-limit, maxval=limit)


def init_gingnn_params(key, in_channels, out_channels, n_layers):
    """Parameter init mirroring the PyTorch module shapes.
    Each layer: Linear(c_in, c_out) -> ReLU -> Linear(c_out, c_out)."""
    params = []
    c_in = in_channels
    for _ in range(n_layers):
        key, k1, k2 = jax.random.split(key, 3)
        w1 = xavier_uniform(k1, c_in, out_channels)
        b1 = jnp.zeros((1, out_channels), jnp.float32)
        w2 = xavier_uniform(k2, out_channels, out_channels)
        b2 = jnp.zeros((1, out_channels), jnp.float32)
        params.append((w1, b1, w2, b2))
        c_in = out_channels
    return params


def edge_index_to_dense_adj(edge_index, num_nodes):
    """Glue (plain JAX): dense adjacency A[dst, src] = edge multiplicity."""
    src = edge_index[0]
    dst = edge_index[1]
    a = jnp.zeros((num_nodes, num_nodes), jnp.float32)
    return a.at[dst, src].add(1.0)


if __name__ == "__main__":
    def run_case(num_nodes, in_channels, out_channels, n_layers, num_edges):
        key = jax.random.PRNGKey(0)
        k_x, k_src, k_dst, k_params = jax.random.split(key, 4)

        x = jax.random.normal(k_x, (num_nodes, in_channels), jnp.float32)
        src = jax.random.randint(k_src, (num_edges,), 0, num_nodes)
        dst = jax.random.randint(k_dst, (num_edges,), 0, num_nodes)
        edge_index = jnp.stack([src, dst], axis=0)          # (2, E), like PyG

        adj = edge_index_to_dense_adj(edge_index, num_nodes)
        params = init_gingnn_params(k_params, in_channels, out_channels,
                                    n_layers)

        out = jax.block_until_ready(gingnn_forward_pallas(x, adj, params))

        expected_channels = in_channels + n_layers * out_channels  # cat=True
        assert out.shape == (num_nodes, expected_channels), out.shape
        assert bool(jnp.all(jnp.isfinite(out)))

        # Loose tolerance: bf16 matmul operands with f32 accumulation.
        ref = gingnn_reference(x, adj, params)
        rel_err = float(jnp.max(jnp.abs(out - ref))
                        / (jnp.max(jnp.abs(ref)) + 1e-6))
        assert rel_err < 0.1, f"max relative error too large: {rel_err}"

    # Case 1: tiny graph -> single row tile, fused (A @ h) @ W1 kernel path.
    run_case(num_nodes=16, in_channels=8, out_channels=32, n_layers=3,
             num_edges=40)
    # Case 2: wide input channels (Cp > Hp -> associativity path) and enough
    # nodes for two 256-row tiles (exercises the "parallel" row grid).
    run_case(num_nodes=300, in_channels=200, out_channels=32, n_layers=2,
             num_edges=900)

    print("KERNEL_OK")
</pallas_src>

<mosaic_0001>
module attributes {stable_mosaic.version = 11 : i64} {
  func.func @kernel(%arg0: i32, %arg1: memref<16x16xbf16, #tpu.memory_space<vmem>>, %arg2: memref<16x128xbf16, #tpu.memory_space<vmem>>, %arg3: memref<256x128xbf16, #tpu.memory_space<vmem>>, %arg4: memref<2x128xf32, #tpu.memory_space<vmem>>, %arg5: memref<16x128xbf16, #tpu.memory_space<vmem>>) attributes {dimension_semantics = [#tpu.dimension_semantics<parallel>], iteration_bounds = array<i64: 1>, scalar_prefetch = 0 : i64, scratch_operands = 0 : i64, tpu.core_type = #tpu.core_type<tc>, window_params = [{transform_indices = @transform_0, window_bounds = array<i64: 16, 16>}, {pipeline_mode = #tpu.pipeline_mode<synchronous>, transform_indices = @transform_1, window_bounds = array<i64: 16, 128>}, {pipeline_mode = #tpu.pipeline_mode<synchronous>, transform_indices = @transform_2, window_bounds = array<i64: 256, 128>}, {pipeline_mode = #tpu.pipeline_mode<synchronous>, transform_indices = @transform_3, window_bounds = array<i64: 2, 128>}, {transform_indices = @transform_4, window_bounds = array<i64: 16, 128>}]} {
    %c0 = arith.constant 0 : index
    %c0_0 = arith.constant 0 : index
    %0 = vector.load %arg4[%c0, %c0_0] : memref<2x128xf32, #tpu.memory_space<vmem>>, vector<2x128xf32>
    %c0_1 = arith.constant 0 : index
    %c0_2 = arith.constant 0 : index
    %1 = vector.load %arg1[%c0_1, %c0_2] : memref<16x16xbf16, #tpu.memory_space<vmem>>, vector<16x16xbf16>
    %c0_3 = arith.constant 0 : index
    %c0_4 = arith.constant 0 : index
    %2 = vector.load %arg2[%c0_3, %c0_4] : memref<16x128xbf16, #tpu.memory_space<vmem>>, vector<16x128xbf16>
    %cst = arith.constant dense<0.000000e+00> : vector<16x128xf32>
    %3 = tpu.matmul %1, %2, %cst {dimension_numbers = #tpu.dot_dimension_numbers<[1], [0], [0], [1], [0, 0, 1, 1], [], []>} : vector<16x16xbf16>, vector<16x128xbf16>, vector<16x128xf32> -> vector<16x128xf32>
    %4 = arith.truncf %3 : vector<16x128xf32> to vector<16x128xbf16>
    %c0_5 = arith.constant 0 : index
    %c0_6 = arith.constant 0 : index
    %5 = vector.load %arg3[%c0_5, %c0_6] : memref<256x128xbf16, #tpu.memory_space<vmem>>, vector<128x128xbf16>
    %cst_7 = arith.constant dense<0.000000e+00> : vector<16x128xf32>
    %6 = tpu.matmul %4, %5, %cst_7 {dimension_numbers = #tpu.dot_dimension_numbers<[1], [0], [0], [1], [0, 0, 1, 1], [], []>} : vector<16x128xbf16>, vector<128x128xbf16>, vector<16x128xf32> -> vector<16x128xf32>
    %7 = vector.extract_strided_slice %0 {offsets = [0, 0], sizes = [1, 128], strides = [1, 1]} : vector<2x128xf32> to vector<1x128xf32>
    %8 = vector.broadcast %7 : vector<1x128xf32> to vector<16x128xf32>
    %9 = arith.addf %6, %8 : vector<16x128xf32>
    %cst_8 = arith.constant 0.000000e+00 : f32
    %10 = vector.broadcast %cst_8 : f32 to vector<16x128xf32>
    %11 = arith.maximumf %9, %10 : vector<16x128xf32>
    %12 = arith.truncf %11 : vector<16x128xf32> to vector<16x128xbf16>
    %c128 = arith.constant 128 : index
    %c0_9 = arith.constant 0 : index
    %13 = vector.load %arg3[%c128, %c0_9] : memref<256x128xbf16, #tpu.memory_space<vmem>>, vector<128x128xbf16>
    %cst_10 = arith.constant dense<0.000000e+00> : vector<16x128xf32>
    %14 = tpu.matmul %12, %13, %cst_10 {dimension_numbers = #tpu.dot_dimension_numbers<[1], [0], [0], [1], [0, 0, 1, 1], [], []>} : vector<16x128xbf16>, vector<128x128xbf16>, vector<16x128xf32> -> vector<16x128xf32>
    %15 = vector.extract_strided_slice %0 {offsets = [1, 0], sizes = [1, 128], strides = [1, 1]} : vector<2x128xf32> to vector<1x128xf32>
    %16 = vector.broadcast %15 : vector<1x128xf32> to vector<16x128xf32>
    %17 = arith.addf %14, %16 : vector<16x128xf32>
    %18 = arith.truncf %17 : vector<16x128xf32> to vector<16x128xbf16>
    %c0_11 = arith.constant 0 : index
    %c0_12 = arith.constant 0 : index
    %19 = vector.load %arg5[%c0_11, %c0_12] : memref<16x128xbf16, #tpu.memory_space<vmem>>, vector<16x128xbf16>
    tpu.vector_store %arg5[%c0_11, %c0_12], %18 {strides = array<i32>} : memref<16x128xbf16, #tpu.memory_space<vmem>>, vector<16x128xbf16>,
    return
  }
  func.func @transform_0(%arg0: i32) -> (i32, i32) {
    %c0_i32 = arith.constant 0 : i32
    %c0_i32_0 = arith.constant 0 : i32
    return %arg0, %c0_i32 : i32, i32
  }
  func.func @transform_1(%arg0: i32) -> (i32, i32) {
    %c0_i32 = arith.constant 0 : i32
    %c0_i32_0 = arith.constant 0 : i32
    %c0_i32_1 = arith.constant 0 : i32
    return %c0_i32, %c0_i32_0 : i32, i32
  }
  func.func @transform_2(%arg0: i32) -> (i32, i32) {
    %c0_i32 = arith.constant 0 : i32
    %c0_i32_0 = arith.constant 0 : i32
    %c0_i32_1 = arith.constant 0 : i32
    return %c0_i32, %c0_i32_0 : i32, i32
  }
  func.func @transform_3(%arg0: i32) -> (i32, i32) {
    %c0_i32 = arith.constant 0 : i32
    %c0_i32_0 = arith.constant 0 : i32
    %c0_i32_1 = arith.constant 0 : i32
    return %c0_i32, %c0_i32_0 : i32, i32
  }
  func.func @transform_4(%arg0: i32) -> (i32, i32) {
    %c0_i32 = arith.constant 0 : i32
    %c0_i32_0 = arith.constant 0 : i32
    return %arg0, %c0_i32 : i32, i32
  }
}

</mosaic_0001>

<llo_original>
// kernel: gingnn_forward_pallas.3
$region0: #{gingnn_forward_pallas.3}
  #allocation0 [shape = 'u32[]', space=smem, size = 0x4, offset = 0x4, fixed_abs, tag = 'smem constant byte address 0x4 - core index']
  #allocation1 [shape = 'u32[72,128]{1,0:T(1,128)}', space=vmem, size = 0x9000, scoped, tag = 'internal scratch']
  %s0 = inlined_call_operand.vmem [shape: bf16[16,16], index: 0, kind: input, shape index: {}]
  %s1 = inlined_call_operand.vmem [shape: bf16[16,128], index: 1, kind: input, shape index: {}]
  %s2 = inlined_call_operand.vmem [shape: bf16[256,128], index: 2, kind: input, shape index: {}]
  %s3 = inlined_call_operand.vmem [shape: f32[2,128], index: 3, kind: input, shape index: {}]
  %s4 = inlined_call_operand.vmem [shape: bf16[16,128], index: 4, kind: output, shape index: {}]
  %s5 = sld [smem:[#allocation0]]
  $region26: #{gingnn_forward_pallas.3} parent=0
    _
  %s7 = ssub.s32 1, %s5
  %s8 = scalar_select 0, %s7, %s5
  // Predicated region
  $region2: #{gingnn_forward_pallas.3} parent=0 // pred_check
    _
  $region3: #{gingnn_forward_pallas.3} parent=0 // pred_check_branch
    %10 = sbr.rel (0) target = $region5
  $region4: #{gingnn_forward_pallas.3} parent=0 // pred_region
    _
  $region5: #{gingnn_forward_pallas.3} parent=0 // pred_fallthru
    _
  // Predicated region
  $region6: #{gingnn_forward_pallas.3} parent=0 // pred_check
    _
  $region7: #{gingnn_forward_pallas.3} parent=0 // pred_check_branch
    %12 = sbr.rel (0) target = $region9
  $region8: #{gingnn_forward_pallas.3} parent=0 // pred_region
    _
  $region9: #{gingnn_forward_pallas.3} parent=0 // pred_fallthru
    _
  // Predicated region
  $region10: #{gingnn_forward_pallas.3} parent=0 // pred_check
    _
  $region11: #{gingnn_forward_pallas.3} parent=0 // pred_check_branch
    %14 = sbr.rel (0) target = $region13
  $region12: #{gingnn_forward_pallas.3} parent=0 // pred_region
    _
  $region13: #{gingnn_forward_pallas.3} parent=0 // pred_fallthru
    _
  // Predicated region
  $region14: #{gingnn_forward_pallas.3} parent=0 // pred_check
    _
  $region15: #{gingnn_forward_pallas.3} parent=0 // pred_check_branch
    %16 = sbr.rel (0) target = $region17
  $region16: #{gingnn_forward_pallas.3} parent=0 // pred_region
    _
  $region17: #{gingnn_forward_pallas.3} parent=0 // pred_fallthru
    _
  %v18 = vld [vmem:[%s3] sm:$0x3]
  %v19 = vld [vmem:[%s0] sm:$0xf]
  %v20 = vld [vmem:[%s0 + $0x4] sm:$0xf]
  %v21 = vld [vmem:[%s1] sm:$0xf]
  %v22 = vld [vmem:[%s1 + $0x4] sm:$0xf]
  %v25 = vunpack.c.l.b16 %v19
  %v26 = vunpack.c.l.b16 %v20
  %v27 = vpack.c.b16 %v26, %v25
  %v30 = vunpack.c.l.b16 %v21
  %v31 = vunpack.c.l.b16 %v22
  %v32 = vpack.c.b16 %v31, %v30
  %vm34 = vcmask 130048
  %v36 = vsel %vm34, %v27, 0
  %38 = vmatpush.bf16.msra.mxu0 0
  %39 = vmatpush.bf16.msra.mxu0 0
  %40 = vmatpush.bf16.msra.mxu0 0
  %41 = vmatpush.bf16.msra.mxu0 0
  %42 = vmatpush.bf16.msra.mxu0 0
  %43 = vmatpush.bf16.msra.mxu0 0
  %44 = vmatpush.bf16.msra.mxu0 0
  %45 = vmatpush.bf16.msra.mxu0 %v32
  %46 = vmatmul.bf16.gmra.mxu0 %v36
  %v47 = vpop.f32.mrf.mxu0
  %v48 = vadd.f32 0.0, %v47
  %v49 = vpop.f32.mrf.mxu0
  %v50 = vadd.f32 0.0, %v49
  %51 = vdwg.mxu0
  %v52 = vpack.c.bf16 %v50, %v48
  %v53 = vld [vmem:[%s2] sm:$0xf]
  %v54 = vld [vmem:[%s2 + $0x4] sm:$0xf]
  %v55 = vld [vmem:[%s2 + $0x8] sm:$0xf]
  %v56 = vld [vmem:[%s2 + $0xc] sm:$0xf]
  %v57 = vld [vmem:[%s2 + $0x10] sm:$0xf]
  %v58 = vld [vmem:[%s2 + $0x14] sm:$0xf]
  %v59 = vld [vmem:[%s2 + $0x18] sm:$0xf]
  %v60 = vld [vmem:[%s2 + $0x1c] sm:$0xf]
  %v61 = vld [vmem:[%s2 + $0x20] sm:$0xf]
  %v62 = vld [vmem:[%s2 + $0x24] sm:$0xf]
  %v63 = vld [vmem:[%s2 + $0x28] sm:$0xf]
  %v64 = vld [vmem:[%s2 + $0x2c] sm:$0xf]
  %v65 = vld [vmem:[%s2 + $0x30] sm:$0xf]
  %v66 = vld [vmem:[%s2 + $0x34] sm:$0xf]
  %v67 = vld [vmem:[%s2 + $0x38] sm:$0xf]
  %v68 = vld [vmem:[%s2 + $0x3c] sm:$0xf]
  %v69 = vperm.slane %v18, 0
  %v86 = vunpack.c.l.b16 %v53
  %v87 = vunpack.c.l.b16 %v54
  %v88 = vunpack.c.l.b16 %v55
  %v89 = vunpack.c.l.b16 %v56
  %v90 = vunpack.c.l.b16 %v57
  %v91 = vunpack.c.l.b16 %v58
  %v92 = vunpack.c.l.b16 %v59
  %v93 = vunpack.c.l.b16 %v60
  %v94 = vunpack.c.l.b16 %v61
  %v95 = vunpack.c.l.b16 %v62
  %v96 = vunpack.c.l.b16 %v63
  %v97 = vunpack.c.l.b16 %v64
  %v98 = vunpack.c.l.b16 %v65
  %v99 = vunpack.c.l.b16 %v66
  %v100 = vunpack.c.l.b16 %v67
  %v101 = vunpack.c.l.b16 %v68
  %v102 = vpack.c.b16 %v87, %v86
  %v103 = vpack.c.b16 %v89, %v88
  %v104 = vpack.c.b16 %v91, %v90
  %v105 = vpack.c.b16 %v93, %v92
  %v106 = vpack.c.b16 %v95, %v94
  %v107 = vpack.c.b16 %v97, %v96
  %v108 = vpack.c.b16 %v99, %v98
  %v109 = vpack.c.b16 %v101, %v100
  %118 = vmatpush.bf16.msra.mxu0 %v109
  %119 = vmatpush.bf16.msra.mxu0 %v108
  %120 = vmatpush.bf16.msra.mxu0 %v107
  %121 = vmatpush.bf16.msra.mxu0 %v106
  %122 = vmatpush.bf16.msra.mxu0 %v105
  %123 = vmatpush.bf16.msra.mxu0 %v104
  %124 = vmatpush.bf16.msra.mxu0 %v103
  %125 = vmatpush.bf16.msra.mxu0 %v102
  %126 = vmatmul.bf16.gmra.mxu0 %v52
  %v127 = vpop.f32.mrf.mxu0
  %v128 = vadd.f32 %v69, %v127
  %v129 = vpop.f32.mrf.mxu0
  %v130 = vadd.f32 %v69, %v129
  %131 = vdwg.mxu0
  %v132 = vmax.f32 %v128, 0.0
  %v133 = vmax.f32 %v130, 0.0
  %v134 = vpack.c.bf16 %v133, %v132
  %v135 = vld [vmem:[%s2 + $0x40] sm:$0xf]
  %v136 = vld [vmem:[%s2 + $0x44] sm:$0xf]
  %v137 = vld [vmem:[%s2 + $0x48] sm:$0xf]
  %v138 = vld [vmem:[%s2 + $0x4c] sm:$0xf]
  %v139 = vld [vmem:[%s2 + $0x50] sm:$0xf]
  %v140 = vld [vmem:[%s2 + $0x54] sm:$0xf]
  %v141 = vld [vmem:[%s2 + $0x58] sm:$0xf]
  %v142 = vld [vmem:[%s2 + $0x5c] sm:$0xf]
  %v143 = vld [vmem:[%s2 + $0x60] sm:$0xf]
  %v144 = vld [vmem:[%s2 + $0x64] sm:$0xf]
  %v145 = vld [vmem:[%s2 + $0x68] sm:$0xf]
  %v146 = vld [vmem:[%s2 + $0x6c] sm:$0xf]
  %v147 = vld [vmem:[%s2 + $0x70] sm:$0xf]
  %v148 = vld [vmem:[%s2 + $0x74] sm:$0xf]
  %v149 = vld [vmem:[%s2 + $0x78] sm:$0xf]
  %v150 = vld [vmem:[%s2 + $0x7c] sm:$0xf]
  %v151 = vperm.slane %v18, 1
  %v168 = vunpack.c.l.b16 %v135
  %v169 = vunpack.c.l.b16 %v136
  %v170 = vunpack.c.l.b16 %v137
  %v171 = vunpack.c.l.b16 %v138
  %v172 = vunpack.c.l.b16 %v139
  %v173 = vunpack.c.l.b16 %v140
  %v174 = vunpack.c.l.b16 %v141
  %v175 = vunpack.c.l.b16 %v142
  %v176 = vunpack.c.l.b16 %v143
  %v177 = vunpack.c.l.b16 %v144
  %v178 = vunpack.c.l.b16 %v145
  %v179 = vunpack.c.l.b16 %v146
  %v180 = vunpack.c.l.b16 %v147
  %v181 = vunpack.c.l.b16 %v148
  %v182 = vunpack.c.l.b16 %v149
  %v183 = vunpack.c.l.b16 %v150
  %v184 = vpack.c.b16 %v169, %v168
  %v185 = vpack.c.b16 %v171, %v170
  %v186 = vpack.c.b16 %v173, %v172
  %v187 = vpack.c.b16 %v175, %v174
  %v188 = vpack.c.b16 %v177, %v176
  %v189 = vpack.c.b16 %v179, %v178
  %v190 = vpack.c.b16 %v181, %v180
  %v191 = vpack.c.b16 %v183, %v182
  %200 = vmatpush.bf16.msra.mxu0 %v191
  %201 = vmatpush.bf16.msra.mxu0 %v190
  %202 = vmatpush.bf16.msra.mxu0 %v189
  %203 = vmatpush.bf16.msra.mxu0 %v188
  %204 = vmatpush.bf16.msra.mxu0 %v187
  %205 = vmatpush.bf16.msra.mxu0 %v186
  %206 = vmatpush.bf16.msra.mxu0 %v185
  %207 = vmatpush.bf16.msra.mxu0 %v184
  %208 = vmatmul.bf16.gmra.mxu0 %v134
  %v209 = vpop.f32.mrf.mxu0
  %v210 = vadd.f32 %v151, %v209
  %v211 = vpop.f32.mrf.mxu0
  %v212 = vadd.f32 %v151, %v211
  %213 = vdwg.mxu0
  %v214 = vpack.c.bf16 %v210, %v210
  %v215 = vpack.c.bf16 %v212, %v212
  %216 = vst [vmem:[%s4] sm:$0xf] %v214
  %217 = vst [vmem:[%s4 + $0x4] sm:$0xf] %v215
  // Predicated region
  $region18: #{gingnn_forward_pallas.3} parent=0 // pred_check
    _
  $region19: #{gingnn_forward_pallas.3} parent=0 // pred_check_branch
    %219 = sbr.rel (0) target = $region21
  $region20: #{gingnn_forward_pallas.3} parent=0 // pred_region
    _
  $region21: #{gingnn_forward_pallas.3} parent=0 // pred_fallthru
    _
  // Predicated region
  $region22: #{gingnn_forward_pallas.3} parent=0 // pred_check
    _
  $region23: #{gingnn_forward_pallas.3} parent=0 // pred_check_branch
    %221 = sbr.rel (0) target = $region25
  $region24: #{gingnn_forward_pallas.3} parent=0 // pred_region
    _
  $region25: #{gingnn_forward_pallas.3} parent=0 // pred_fallthru
    _

</llo_original>
